<compile_context>
chip_gen: v5e
topology: v5e:2x2
jax: 0.10.0
libtpu: 0.0.40
codegen_flags: <defaults>
</compile_context>

<pallas_src>
import functools
import math

import jax
import jax.numpy as jnp
from jax import lax
from jax.experimental import pallas as pl
from jax.experimental.pallas import tpu as pltpu


def _self_attention_kernel(x_ref, wq_ref, wk_ref, wpv_ref, bq_ref, bk_ref,
                           vones_ref, bout_ref, o_ref, k_s, vp_s,
                           *, tq, c, hoist):
    """One (batch, query-tile) grid step; everything channels-first.

    x_ref    : (1, C, N)  full spatial row of x (K/V source + query/residual slice)
    wq_ref   : (CP, C)    q weights, 1/sqrt(C) pre-folded, zero-padded rows
    wk_ref   : (CP, C)    k weights, zero-padded rows
    wpv_ref  : (VP, C)    w_proj @ w_v (output projection folded into V), padded
    bq_ref   : (CP, 1)    scaled+padded;  bk_ref: (CP, 1) padded
    vones_ref: (VP, 1)    0 for rows < C, 1 for rows >= C (denominator rows)
    bout_ref : (C, 1)     w_proj @ b_v + b_proj (added after normalization)
    o_ref    : (1, C, TQ)
    k_s      : (CP, N) bf16 scratch;  vp_s: (VP, N) bf16 scratch
    """
    f32 = jnp.float32
    bf16 = jnp.bfloat16
    qi = pl.program_id(1)

    def project_kv():
        x_row = x_ref[0]                                                  # (C, N)
        k = jnp.dot(wk_ref[...], x_row, preferred_element_type=f32) + bk_ref[...]
        k_s[...] = k.astype(bf16)                                         # (CP, N)
        # Folded V; rows >= C become all-ones so the attention matmul below also
        # emits the softmax denominator (deferred normalization).
        v = jnp.dot(wpv_ref[...], x_row, preferred_element_type=f32) + vones_ref[...]
        vp_s[...] = v.astype(bf16)                                        # (VP, N)

    if hoist:
        @pl.when(qi == 0)
        def _():
            project_kv()
    else:
        project_kv()

    # Query / residual tile sliced from the resident row — no duplicate x DMA.
    start = pl.multiple_of(qi * tq, math.gcd(tq, 128))
    xq = x_ref[0, :, pl.ds(start, tq)]                                    # (C, TQ)

    q = jnp.dot(wq_ref[...], xq, preferred_element_type=f32) + bq_ref[...]  # (CP, TQ)

    # Key-major scores: scores[j, i] = sum_c k[c, j] * q[c, i]. Contraction is
    # the tiny padded channel axis; the (N, TQ) slab is produced lane-dense and
    # never relayouted. bf16 MXU operands, f32 accumulation.
    scores = lax.dot_general(k_s[...], q.astype(bf16),
                             (((0,), (0,)), ((), ())),
                             preferred_element_type=f32)                  # (N, TQ)

    # Softmax over keys (sublane axis). Normalization is deferred onto the
    # ones rows of V — no lane-sum / full-slab multiply here.
    p = jnp.exp(scores - jnp.max(scores, axis=0, keepdims=True)).astype(bf16)

    # acc[r, i] = sum_j vp[r, j] * p[j, i] : canonical NN MXU matmul (no
    # transpose of the probability slab). Rows < C hold the unnormalized,
    # already-projected attention output; rows >= C hold the denominator.
    acc = jnp.dot(vp_s[...], p, preferred_element_type=f32)               # (VP, TQ)

    inv = 1.0 / acc[c:c + 1, :]                       # exact reciprocal, (1, TQ) only
    out = acc[:c, :] * inv + bout_ref[...] + xq       # + folded bias + residual
    o_ref[0] = out.astype(o_ref.dtype)


def _vmem_budget():
    """Generation-aware (live-slab budget, vmem_limit_bytes) ≈ (cap/4, cap/2).
    128 MiB VMEM (v5e/v6e) -> 32 / 64 MiB;  64 MiB per-TC (v7x) -> 16 / 32 MiB."""
    try:
        cap = int(pltpu.get_tpu_info().vmem_capacity_bytes)
    except Exception:  # conservative fallback if the query is unavailable
        cap = 64 * 1024 * 1024
    return cap // 4, cap // 2


def _pick_query_tile(n, live_budget_bytes):
    """Largest legal query tile (multiple of 128 dividing N, or N itself) whose
    live (N, TQ) f32-scores + bf16-probability slabs fit the budget."""
    def live_bytes(tq):
        return 7 * n * tq          # 4*N*TQ f32 scores + 2*N*TQ bf16 p + slack
    cands = sorted({t for t in range(128, n, 128) if n % t == 0} | {n}, reverse=True)
    for tq in cands:
        if live_bytes(tq) <= live_budget_bytes:
            return tq
    tq = cands[-1]
    assert live_bytes(tq) <= live_budget_bytes, (
        f"N={n}: even the smallest legal query tile ({tq}) exceeds the VMEM "
        f"budget ({live_budget_bytes} bytes)")
    return tq


def self_attention_pallas(x_nchw, w_qkv, b_qkv, w_proj, b_proj):
    """x_nchw: (B, C, H, W). PyTorch Conv1d weights (kernel-size-1 squeezed):
       w_qkv: (3C, C), b_qkv: (3C,), w_proj: (C, C), b_proj: (C,)."""
    B, C, H, W = x_nchw.shape
    N = H * W
    CP = -(-C // 8) * 8            # q/k out-channels padded to a sublane multiple
    VP = -(-(C + 1) // 8) * 8      # folded-V channels + >=1 all-ones denominator row

    f32 = jnp.float32
    x = x_nchw.reshape(B, C, N).astype(f32)     # channels-first: pure reshape of NCHW

    inv_sqrt_c = 1.0 / math.sqrt(C)
    w_q = w_qkv[:C].astype(f32) * inv_sqrt_c    # fold softmax scale into q projection
    w_k = w_qkv[C:2 * C].astype(f32)
    w_v = w_qkv[2 * C:].astype(f32)
    b_q = b_qkv[:C].astype(f32) * inv_sqrt_c
    b_k = b_qkv[C:2 * C].astype(f32)
    b_v = b_qkv[2 * C:].astype(f32)
    w_p = w_proj.astype(f32)
    b_p = b_proj.astype(f32)

    # Fold the output projection into V (exact: the deferred-normalization
    # denominator makes rowsum(P)/denom == 1); bias is added post-normalization.
    w_pv = w_p @ w_v                                        # (C, C)
    b_out = (w_p @ b_v + b_p).reshape(C, 1)                 # (C, 1)

    pad_rows = ((0, CP - C), (0, 0))
    w_qp = jnp.pad(w_q, pad_rows)                           # (CP, C)
    w_kp = jnp.pad(w_k, pad_rows)                           # (CP, C)
    b_qp = jnp.pad(b_q.reshape(C, 1), pad_rows)             # (CP, 1)
    b_kp = jnp.pad(b_k.reshape(C, 1), pad_rows)             # (CP, 1)
    w_pvp = jnp.pad(w_pv, ((0, VP - C), (0, 0)))            # (VP, C), zero rows beyond C
    v_ones = jnp.concatenate(                               # (VP, 1): 0 real rows,
        [jnp.zeros((C, 1), f32), jnp.ones((VP - C, 1), f32)], axis=0)  # 1 denominator rows

    live_budget, vmem_limit = _vmem_budget()
    TQ = _pick_query_tile(N, live_budget)
    n_q = N // TQ
    # Keep >=2 independent parallel grid steps so 2-TC chips (v7x) stay busy.
    if B * n_q < 2 and TQ % 256 == 0:
        TQ //= 2
        n_q = N // TQ
    # Hoist K/V projection out of the query-tile loop (scratch persists across
    # qi) unless that would serialize the only parallel axis (B == 1).
    hoist = (n_q == 1) or (B >= 2)

    kernel = functools.partial(_self_attention_kernel, tq=TQ, c=C, hoist=hoist)
    const = lambda b, qi: (0, 0)

    out = pl.pallas_call(
        kernel,
        out_shape=jax.ShapeDtypeStruct((B, C, N), f32),
        grid_spec=pltpu.PrefetchScalarGridSpec(
            num_scalar_prefetch=0,
            grid=(B, n_q),
            in_specs=[
                pl.BlockSpec((1, C, N), lambda b, qi: (b, 0, 0)),  # x (K/V + q/residual)
                pl.BlockSpec((CP, C), const),                      # w_q (scaled, padded)
                pl.BlockSpec((CP, C), const),                      # w_k (padded)
                pl.BlockSpec((VP, C), const),                      # w_proj @ w_v (padded)
                pl.BlockSpec((CP, 1), const),                      # b_q (scaled, padded)
                pl.BlockSpec((CP, 1), const),                      # b_k (padded)
                pl.BlockSpec((VP, 1), const),                      # denominator-row ones
                pl.BlockSpec((C, 1), const),                       # w_proj@b_v + b_proj
            ],
            out_specs=pl.BlockSpec((1, C, TQ), lambda b, qi: (b, 0, qi)),
            scratch_shapes=[
                pltpu.VMEM((CP, N), jnp.bfloat16),                 # K, resident per batch
                pltpu.VMEM((VP, N), jnp.bfloat16),                 # folded V + ones rows
            ],
        ),
        compiler_params=pltpu.CompilerParams(
            dimension_semantics=("parallel", "arbitrary" if hoist else "parallel"),
            vmem_limit_bytes=vmem_limit,
        ),
    )(x, w_qp, w_kp, w_pvp, b_qp, b_kp, v_ones, b_out)

    return out.reshape(B, C, H, W).astype(x_nchw.dtype)


def _reference_jax(x_nchw, w_qkv, b_qkv, w_proj, b_proj):
    """Pure-JAX reference mirroring the PyTorch forward exactly (NCHW math)."""
    B, C, H, W = x_nchw.shape
    x_flat = x_nchw.reshape(B, C, H * W).astype(jnp.float32)
    qkv = jnp.einsum("oc,bcn->bon", w_qkv, x_flat) + b_qkv[None, :, None]
    q, k, v = jnp.split(qkv, 3, axis=1)
    scores = jnp.einsum("bci,bcj->bij", q, k) / math.sqrt(C)
    weights = jax.nn.softmax(scores, axis=-1)
    out = jnp.einsum("bcj,bij->bci", v, weights)
    proj = jnp.einsum("oc,bcn->bon", w_proj, out) + b_proj[None, :, None]
    return proj.reshape(B, C, H, W) + x_nchw


if __name__ == "__main__":
    B, C, H, W = 2, 4, 16, 16

    key = jax.random.PRNGKey(0)
    kx, k1, k2, k3, k4 = jax.random.split(key, 5)

    x = jax.random.normal(kx, (B, C, H, W), dtype=jnp.float32)

    # Deterministic parameter init (Conv1d weight (out, in, 1) -> squeeze k=1).
    bound = 1.0 / math.sqrt(C)
    w_qkv = jax.random.uniform(k1, (3 * C, C), jnp.float32, -bound, bound)
    b_qkv = jax.random.uniform(k2, (3 * C,), jnp.float32, -bound, bound)
    w_proj = jax.random.uniform(k3, (C, C), jnp.float32, -bound, bound)
    b_proj = jax.random.uniform(k4, (C,), jnp.float32, -bound, bound)

    y = self_attention_pallas(x, w_qkv, b_qkv, w_proj, b_proj)
    y = jax.block_until_ready(y)

    y_ref = _reference_jax(x, w_qkv, b_qkv, w_proj, b_proj)
    assert y.shape == (B, C, H, W)
    # Tolerance accounts for bf16 MXU operands on the two large matmuls
    # (scores, attention); accumulation and softmax stay in f32.
    assert jnp.allclose(y, y_ref, atol=2e-2, rtol=2e-2), "mismatch vs reference"

    print("KERNEL_OK")
</pallas_src>

<mosaic_0001>
module attributes {stable_mosaic.version = 11 : i64} {
  func.func @_self_attention_kernel(%arg0: i32, %arg1: i32, %arg2: memref<1x4x256xf32, #tpu.memory_space<vmem>>, %arg3: memref<8x4xf32, #tpu.memory_space<vmem>>, %arg4: memref<8x4xf32, #tpu.memory_space<vmem>>, %arg5: memref<8x4xf32, #tpu.memory_space<vmem>>, %arg6: memref<8x1xf32, #tpu.memory_space<vmem>>, %arg7: memref<8x1xf32, #tpu.memory_space<vmem>>, %arg8: memref<8x1xf32, #tpu.memory_space<vmem>>, %arg9: memref<4x1xf32, #tpu.memory_space<vmem>>, %arg10: memref<1x4x256xf32, #tpu.memory_space<vmem>>, %arg11: memref<8x256xbf16, #tpu.memory_space<vmem>>, %arg12: memref<8x256xbf16, #tpu.memory_space<vmem>>) attributes {dimension_semantics = [#tpu.dimension_semantics<parallel>, #tpu.dimension_semantics<arbitrary>], iteration_bounds = array<i64: 2, 1>, scalar_prefetch = 0 : i64, scratch_operands = 2 : i64, tpu.core_type = #tpu.core_type<tc>, window_params = [{transform_indices = @transform_0, window_bounds = array<i64: 1, 4, 256>}, {pipeline_mode = #tpu.pipeline_mode<synchronous>, transform_indices = @transform_1, window_bounds = array<i64: 8, 4>}, {pipeline_mode = #tpu.pipeline_mode<synchronous>, transform_indices = @transform_2, window_bounds = array<i64: 8, 4>}, {pipeline_mode = #tpu.pipeline_mode<synchronous>, transform_indices = @transform_3, window_bounds = array<i64: 8, 4>}, {pipeline_mode = #tpu.pipeline_mode<synchronous>, transform_indices = @transform_4, window_bounds = array<i64: 8, 1>}, {pipeline_mode = #tpu.pipeline_mode<synchronous>, transform_indices = @transform_5, window_bounds = array<i64: 8, 1>}, {pipeline_mode = #tpu.pipeline_mode<synchronous>, transform_indices = @transform_6, window_bounds = array<i64: 8, 1>}, {pipeline_mode = #tpu.pipeline_mode<synchronous>, transform_indices = @transform_7, window_bounds = array<i64: 4, 1>}, {transform_indices = @transform_8, window_bounds = array<i64: 1, 4, 256>}]} {
    %c0_i32 = arith.constant 0 : i32
    %0 = arith.cmpi eq, %arg1, %c0_i32 : i32
    %1 = arith.extui %0 : i1 to i32
    %c0_i32_0 = arith.constant 0 : i32
    %2 = arith.cmpi ne, %1, %c0_i32_0 : i32
    scf.if %2 {
      %c0_19 = arith.constant 0 : index
      %c0_20 = arith.constant 0 : index
      %c0_21 = arith.constant 0 : index
      %37 = vector.load %arg2[%c0_19, %c0_20, %c0_21] : memref<1x4x256xf32, #tpu.memory_space<vmem>>, vector<1x4x256xf32>
      %38 = vector.shape_cast %37 : vector<1x4x256xf32> to vector<4x256xf32>
      %c0_22 = arith.constant 0 : index
      %c0_23 = arith.constant 0 : index
      %39 = vector.load %arg4[%c0_22, %c0_23] : memref<8x4xf32, #tpu.memory_space<vmem>>, vector<8x4xf32>
      %cst_24 = arith.constant dense<0.000000e+00> : vector<8x256xf32>
      %40 = tpu.matmul %39, %38, %cst_24 {dimension_numbers = #tpu.dot_dimension_numbers<[1], [0], [0], [1], [0, 0, 1, 1], [], []>} : vector<8x4xf32>, vector<4x256xf32>, vector<8x256xf32> -> vector<8x256xf32>
      %c0_25 = arith.constant 0 : index
      %c0_26 = arith.constant 0 : index
      %41 = vector.load %arg7[%c0_25, %c0_26] : memref<8x1xf32, #tpu.memory_space<vmem>>, vector<8x1xf32>
      %42 = vector.broadcast %41 : vector<8x1xf32> to vector<8x256xf32>
      %43 = arith.addf %40, %42 : vector<8x256xf32>
      %44 = arith.truncf %43 : vector<8x256xf32> to vector<8x256xbf16>
      %c0_27 = arith.constant 0 : index
      %c0_28 = arith.constant 0 : index
      %45 = vector.load %arg11[%c0_27, %c0_28] : memref<8x256xbf16, #tpu.memory_space<vmem>>, vector<8x256xbf16>
      tpu.vector_store %arg11[%c0_27, %c0_28], %44 {strides = array<i32>} : memref<8x256xbf16, #tpu.memory_space<vmem>>, vector<8x256xbf16>,
      %c0_29 = arith.constant 0 : index
      %c0_30 = arith.constant 0 : index
      %46 = vector.load %arg5[%c0_29, %c0_30] : memref<8x4xf32, #tpu.memory_space<vmem>>, vector<8x4xf32>
      %cst_31 = arith.constant dense<0.000000e+00> : vector<8x256xf32>
      %47 = tpu.matmul %46, %38, %cst_31 {dimension_numbers = #tpu.dot_dimension_numbers<[1], [0], [0], [1], [0, 0, 1, 1], [], []>} : vector<8x4xf32>, vector<4x256xf32>, vector<8x256xf32> -> vector<8x256xf32>
      %c0_32 = arith.constant 0 : index
      %c0_33 = arith.constant 0 : index
      %48 = vector.load %arg8[%c0_32, %c0_33] : memref<8x1xf32, #tpu.memory_space<vmem>>, vector<8x1xf32>
      %49 = vector.broadcast %48 : vector<8x1xf32> to vector<8x256xf32>
      %50 = arith.addf %47, %49 : vector<8x256xf32>
      %51 = arith.truncf %50 : vector<8x256xf32> to vector<8x256xbf16>
      %c0_34 = arith.constant 0 : index
      %c0_35 = arith.constant 0 : index
      %52 = vector.load %arg12[%c0_34, %c0_35] : memref<8x256xbf16, #tpu.memory_space<vmem>>, vector<8x256xbf16>
      tpu.vector_store %arg12[%c0_34, %c0_35], %51 {strides = array<i32>} : memref<8x256xbf16, #tpu.memory_space<vmem>>, vector<8x256xbf16>,
    } else {
    }
    %c256_i32 = arith.constant 256 : i32
    %3 = arith.muli %arg1, %c256_i32 : i32
    %4 = tpu.assume_multiple %3, 128 : i32
    %c0 = arith.constant 0 : index
    %c0_1 = arith.constant 0 : index
    %5 = arith.index_cast %4 : i32 to index
    %6 = vector.load %arg2[%c0, %c0_1, %5] : memref<1x4x256xf32, #tpu.memory_space<vmem>>, vector<1x4x256xf32>
    %7 = vector.shape_cast %6 : vector<1x4x256xf32> to vector<4x256xf32>
    %c0_2 = arith.constant 0 : index
    %c0_3 = arith.constant 0 : index
    %8 = vector.load %arg3[%c0_2, %c0_3] : memref<8x4xf32, #tpu.memory_space<vmem>>, vector<8x4xf32>
    %cst = arith.constant dense<0.000000e+00> : vector<8x256xf32>
    %9 = tpu.matmul %8, %7, %cst {dimension_numbers = #tpu.dot_dimension_numbers<[1], [0], [0], [1], [0, 0, 1, 1], [], []>} : vector<8x4xf32>, vector<4x256xf32>, vector<8x256xf32> -> vector<8x256xf32>
    %c0_4 = arith.constant 0 : index
    %c0_5 = arith.constant 0 : index
    %10 = vector.load %arg6[%c0_4, %c0_5] : memref<8x1xf32, #tpu.memory_space<vmem>>, vector<8x1xf32>
    %11 = vector.broadcast %10 : vector<8x1xf32> to vector<8x256xf32>
    %12 = arith.addf %9, %11 : vector<8x256xf32>
    %c0_6 = arith.constant 0 : index
    %c0_7 = arith.constant 0 : index
    %13 = vector.load %arg11[%c0_6, %c0_7] : memref<8x256xbf16, #tpu.memory_space<vmem>>, vector<8x256xbf16>
    %14 = arith.truncf %12 : vector<8x256xf32> to vector<8x256xbf16>
    %cst_8 = arith.constant dense<0.000000e+00> : vector<256x256xf32>
    %15 = tpu.matmul %13, %14, %cst_8 {dimension_numbers = #tpu.dot_dimension_numbers<[0], [0], [1], [1], [0, 1, 1, 1], [], []>} : vector<8x256xbf16>, vector<8x256xbf16>, vector<256x256xf32> -> vector<256x256xf32>
    %cst_9 = arith.constant dense<0xFF800000> : vector<256xf32>
    %16 = vector.multi_reduction <maximumf>, %15, %cst_9 [0] : vector<256x256xf32> to vector<256xf32>
    %17 = vector.shape_cast %16 : vector<256xf32> to vector<1x256xf32>
    %18 = vector.broadcast %17 : vector<1x256xf32> to vector<256x256xf32>
    %19 = arith.subf %15, %18 : vector<256x256xf32>
    %20 = math.exp %19 : vector<256x256xf32>
    %21 = arith.truncf %20 : vector<256x256xf32> to vector<256x256xbf16>
    %c0_10 = arith.constant 0 : index
    %c0_11 = arith.constant 0 : index
    %22 = vector.load %arg12[%c0_10, %c0_11] : memref<8x256xbf16, #tpu.memory_space<vmem>>, vector<8x256xbf16>
    %cst_12 = arith.constant dense<0.000000e+00> : vector<8x256xf32>
    %23 = tpu.matmul %22, %21, %cst_12 {dimension_numbers = #tpu.dot_dimension_numbers<[1], [0], [0], [1], [0, 0, 1, 1], [], []>} : vector<8x256xbf16>, vector<256x256xbf16>, vector<8x256xf32> -> vector<8x256xf32>
    %24 = vector.extract_strided_slice %23 {offsets = [4, 0], sizes = [1, 256], strides = [1, 1]} : vector<8x256xf32> to vector<1x256xf32>
    %cst_13 = arith.constant 1.000000e+00 : f32
    %25 = vector.broadcast %cst_13 : f32 to vector<1x256xf32>
    %26 = arith.divf %25, %24 : vector<1x256xf32>
    %27 = vector.extract_strided_slice %23 {offsets = [0, 0], sizes = [4, 256], strides = [1, 1]} : vector<8x256xf32> to vector<4x256xf32>
    %28 = vector.broadcast %26 : vector<1x256xf32> to vector<4x256xf32>
    %29 = arith.mulf %27, %28 : vector<4x256xf32>
    %c0_14 = arith.constant 0 : index
    %c0_15 = arith.constant 0 : index
    %30 = vector.load %arg9[%c0_14, %c0_15] : memref<4x1xf32, #tpu.memory_space<vmem>>, vector<4x1xf32>
    %31 = vector.broadcast %30 : vector<4x1xf32> to vector<4x256xf32>
    %32 = arith.addf %29, %31 : vector<4x256xf32>
    %33 = arith.addf %32, %7 : vector<4x256xf32>
    %c0_16 = arith.constant 0 : index
    %c0_17 = arith.constant 0 : index
    %c0_18 = arith.constant 0 : index
    %34 = vector.load %arg10[%c0_16, %c0_17, %c0_18] : memref<1x4x256xf32, #tpu.memory_space<vmem>>, vector<1x4x256xf32>
    %35 = vector.shape_cast %34 : vector<1x4x256xf32> to vector<4x256xf32>
    %36 = vector.shape_cast %33 : vector<4x256xf32> to vector<1x4x256xf32>
    tpu.vector_store %arg10[%c0_16, %c0_17, %c0_18], %36 {strides = array<i32>} : memref<1x4x256xf32, #tpu.memory_space<vmem>>, vector<1x4x256xf32>,
    return
  }
  func.func @transform_0(%arg0: i32, %arg1: i32) -> (i32, i32, i32) {
    %c0_i32 = arith.constant 0 : i32
    %c0_i32_0 = arith.constant 0 : i32
    %c0_i32_1 = arith.constant 0 : i32
    return %arg0, %c0_i32, %c0_i32_0 : i32, i32, i32
  }
  func.func @transform_1(%arg0: i32, %arg1: i32) -> (i32, i32) {
    %c0_i32 = arith.constant 0 : i32
    %c0_i32_0 = arith.constant 0 : i32
    %c0_i32_1 = arith.constant 0 : i32
    return %c0_i32, %c0_i32_0 : i32, i32
  }
  func.func @transform_2(%arg0: i32, %arg1: i32) -> (i32, i32) {
    %c0_i32 = arith.constant 0 : i32
    %c0_i32_0 = arith.constant 0 : i32
    %c0_i32_1 = arith.constant 0 : i32
    return %c0_i32, %c0_i32_0 : i32, i32
  }
  func.func @transform_3(%arg0: i32, %arg1: i32) -> (i32, i32) {
    %c0_i32 = arith.constant 0 : i32
    %c0_i32_0 = arith.constant 0 : i32
    %c0_i32_1 = arith.constant 0 : i32
    return %c0_i32, %c0_i32_0 : i32, i32
  }
  func.func @transform_4(%arg0: i32, %arg1: i32) -> (i32, i32) {
    %c0_i32 = arith.constant 0 : i32
    %c0_i32_0 = arith.constant 0 : i32
    %c0_i32_1 = arith.constant 0 : i32
    return %c0_i32, %c0_i32_0 : i32, i32
  }
  func.func @transform_5(%arg0: i32, %arg1: i32) -> (i32, i32) {
    %c0_i32 = arith.constant 0 : i32
    %c0_i32_0 = arith.constant 0 : i32
    %c0_i32_1 = arith.constant 0 : i32
    return %c0_i32, %c0_i32_0 : i32, i32
  }
  func.func @transform_6(%arg0: i32, %arg1: i32) -> (i32, i32) {
    %c0_i32 = arith.constant 0 : i32
    %c0_i32_0 = arith.constant 0 : i32
    %c0_i32_1 = arith.constant 0 : i32
    return %c0_i32, %c0_i32_0 : i32, i32
  }
  func.func @transform_7(%arg0: i32, %arg1: i32) -> (i32, i32) {
    %c0_i32 = arith.constant 0 : i32
    %c0_i32_0 = arith.constant 0 : i32
    %c0_i32_1 = arith.constant 0 : i32
    return %c0_i32, %c0_i32_0 : i32, i32
  }
  func.func @transform_8(%arg0: i32, %arg1: i32) -> (i32, i32, i32) {
    %c0_i32 = arith.constant 0 : i32
    %c0_i32_0 = arith.constant 0 : i32
    return %arg0, %c0_i32, %arg1 : i32, i32, i32
  }
}

</mosaic_0001>

<llo_original>
// kernel: tpu_custom_call.1
$region0: #{tpu_custom_call.1}
  #allocation0 [shape = 'u32[]', space=smem, size = 0x4, offset = 0x4, fixed_abs, tag = 'smem constant byte address 0x4 - core index']
  #allocation1 [shape = 'u32[72,128]{1,0:T(1,128)}', space=vmem, size = 0x9000, scoped, tag = 'internal scratch']
  #allocation2 [shape = 'bf16[8,256]{1,0:T(8,128)(2,1)}', space=vmem, size = 0x1000, scoped, tag = 'scratch operand']
  #allocation3 [shape = 'bf16[8,256]{1,0:T(8,128)(2,1)}', space=vmem, size = 0x1000, scoped, tag = 'scratch operand']
  %s0 = inlined_call_operand.vmem [shape: f32[2,4,256], index: 0, kind: input, shape index: {}]
  %s1 = inlined_call_operand.vmem [shape: f32[8,4], index: 1, kind: input, shape index: {}]
  %s2 = inlined_call_operand.vmem [shape: f32[8,4], index: 2, kind: input, shape index: {}]
  %s3 = inlined_call_operand.vmem [shape: f32[8,4], index: 3, kind: input, shape index: {}]
  %s4 = inlined_call_operand.vmem [shape: f32[8,1], index: 4, kind: input, shape index: {}]
  %s5 = inlined_call_operand.vmem [shape: f32[8,1], index: 5, kind: input, shape index: {}]
  %s6 = inlined_call_operand.vmem [shape: f32[8,1], index: 6, kind: input, shape index: {}]
  %s7 = inlined_call_operand.vmem [shape: f32[4,1], index: 7, kind: input, shape index: {}]
  %s8 = inlined_call_operand.hbm [shape: f32[2,4,256], index: 8, kind: output, shape index: {}]
  %s9 = sld [smem:[#allocation0]]
  $region69: #{tpu_custom_call.1} parent=0
    _
  %s11 = ssub.s32 1, %s9
  %s12 = scalar_select 0, %s11, %s9
  $region1: #{tpu_custom_call.1} parent=0
    #allocation4 [shape = 'u8[8192]{0}', space=vmem, size = 0x2000, scoped, tag = 'output window, operand 0']
    #allocation5 [shape = 's32[2]{0}', space=sflag, size = 0x8, scoped, tag = 'scoped memory for tpu_custom_call.1']
    %13 = vsyncpa [#allocation5], 0
    %s14 = scalar_lea.sflag [#allocation5], 1
    %15 = vsyncpa %s14, 0
    loop: start=0, step=1, limit=4
    $region2: #{tpu_custom_call.1} parent=1 // loop_pre_header
      _
    $region3: #{tpu_custom_call.1} parent=1 // loop_header
      %s17 = sphi 0, %s21
      %p18 = scmp.ge.s32.totalorder %s17, 4
      %s24 = sphi 0, %s36
      %s25 = sphi 0, %s32
      %s26 = sphi 0, %s24
      %s27 = sphi 0, %s25
      %s28 = sphi 0, %s26
      %s29 = sphi 0, %s27
      %s39 = sphi 0, %s41
      %s42 = sphi 0, %s39
      %s43 = sphi 0, %s42
      %s59 = sphi 0, %s43
      %s63 = sphi 0, %s63
      %s65 = sphi 0, %s63
      %s66 = sphi 0, %s65
      %s80 = sphi 0, %s66
      %s84 = sphi 0, %s84
      %s86 = sphi 0, %s84
      %s87 = sphi 0, %s86
      %s101 = sphi 0, %s87
      %s105 = sphi 0, %s105
      %s107 = sphi 0, %s105
      %s108 = sphi 0, %s107
      %s122 = sphi 0, %s108
      %s126 = sphi 0, %s126
      %s128 = sphi 0, %s126
      %s129 = sphi 0, %s128
      %s143 = sphi 0, %s129
      %s147 = sphi 0, %s147
      %s149 = sphi 0, %s147
      %s150 = sphi 0, %s149
      %s164 = sphi 0, %s150
      %s168 = sphi 0, %s168
      %s170 = sphi 0, %s168
      %s171 = sphi 0, %s170
      %s185 = sphi 0, %s171
      %s189 = sphi 0, %s189
      %s191 = sphi 0, %s189
      %s192 = sphi 0, %s191
      %s206 = sphi 0, %s192
      %s214 = sphi 0, %s216
      %s217 = sphi 0, %s214
      %s218 = sphi 0, %s217
      %s234 = sphi 0, %s218
    $region4: #{tpu_custom_call.1} parent=1 // loop_header_branch
      %20 = sbr.rel (%p18) target = $region8
    $region5: #{tpu_custom_call.1} parent=1 // loop_body
      %s22 = ssub.s32 %s17, 1
      %s23 = ssub.s32 %s17, 2
      %s30 = sadd.s32 1, %s25
      %p31 = scmp.ge.s32.totalorder %s30, 1
      %s32 = scalar_select %p31, 0, %s30
      %s33 = sadd.s32 1, %s24
      %s34 = scalar_select %p31, %s33, %s24
      %p35 = scmp.ge.s32.totalorder %s34, 2
      %s36 = scalar_select %p35, 0, %s34
      %s37 = ssub.s32 %s24, %s36
      %p38 = scmp.eq.s32.totalorder %s37, 0
      %s40 = sadd.s32 %s39, 1
      %s41 = scalar_select %p38, %s39, %s40
      %p44 = pneg %p38
      %p45 = scmp.eq.s32.totalorder %s17, 1
      %p46 = por %p44, %p45
      %p47 = scmp.ne.s32.totalorder %s39, %s42
      %p48 = scmp.eq.s32.totalorder %s17, 0
      %p49 = por %p47, %p48
      %p50 = scmp.ne.s32.totalorder %s39, %s42
      %p51 = scmp.eq.s32.totalorder %s22, 1
      %p52 = por %p50, %p51
      %p53 = scmp.ne.s32.totalorder %s42, %s43
      %p54 = scmp.eq.s32.totalorder %s22, 0
      %p55 = por %p53, %p54
      %p56 = scmp.ne.s32.totalorder %s42, %s43
      %p57 = scmp.eq.s32.totalorder %s23, 1
      %p58 = por %p56, %p57
      %p60 = scmp.ne.s32.totalorder %s43, %s59
      %p61 = scmp.eq.s32.totalorder %s23, 0
      %p62 = por %p60, %p61
      %s64 = sadd.s32 %s63, 1
      %p67 = scmp.eq.s32.totalorder %s17, 1
      %p68 = scmp.ne.s32.totalorder %s63, %s65
      %p69 = scmp.eq.s32.totalorder %s17, 0
      %p70 = por %p68, %p69
      %p71 = scmp.ne.s32.totalorder %s63, %s65
      %p72 = scmp.eq.s32.totalorder %s22, 1
      %p73 = por %p71, %p72
      %p74 = scmp.ne.s32.totalorder %s65, %s66
      %p75 = scmp.eq.s32.totalorder %s22, 0
      %p76 = por %p74, %p75
      %p77 = scmp.ne.s32.totalorder %s65, %s66
      %p78 = scmp.eq.s32.totalorder %s23, 1
      %p79 = por %p77, %p78
      %p81 = scmp.ne.s32.totalorder %s66, %s80
      %p82 = scmp.eq.s32.totalorder %s23, 0
      %p83 = por %p81, %p82
      %s85 = sadd.s32 %s84, 1
      %p88 = scmp.eq.s32.totalorder %s17, 1
      %p89 = scmp.ne.s32.totalorder %s84, %s86
      %p90 = scmp.eq.s32.totalorder %s17, 0
      %p91 = por %p89, %p90
      %p92 = scmp.ne.s32.totalorder %s84, %s86
      %p93 = scmp.eq.s32.totalorder %s22, 1
      %p94 = por %p92, %p93
      %p95 = scmp.ne.s32.totalorder %s86, %s87
      %p96 = scmp.eq.s32.totalorder %s22, 0
      %p97 = por %p95, %p96
      %p98 = scmp.ne.s32.totalorder %s86, %s87
      %p99 = scmp.eq.s32.totalorder %s23, 1
      %p100 = por %p98, %p99
      %p102 = scmp.ne.s32.totalorder %s87, %s101
      %p103 = scmp.eq.s32.totalorder %s23, 0
      %p104 = por %p102, %p103
      %s106 = sadd.s32 %s105, 1
      %p109 = scmp.eq.s32.totalorder %s17, 1
      %p110 = scmp.ne.s32.totalorder %s105, %s107
      %p111 = scmp.eq.s32.totalorder %s17, 0
      %p112 = por %p110, %p111
      %p113 = scmp.ne.s32.totalorder %s105, %s107
      %p114 = scmp.eq.s32.totalorder %s22, 1
      %p115 = por %p113, %p114
      %p116 = scmp.ne.s32.totalorder %s107, %s108
      %p117 = scmp.eq.s32.totalorder %s22, 0
      %p118 = por %p116, %p117
      %p119 = scmp.ne.s32.totalorder %s107, %s108
      %p120 = scmp.eq.s32.totalorder %s23, 1
      %p121 = por %p119, %p120
      %p123 = scmp.ne.s32.totalorder %s108, %s122
      %p124 = scmp.eq.s32.totalorder %s23, 0
      %p125 = por %p123, %p124
      %s127 = sadd.s32 %s126, 1
      %p130 = scmp.eq.s32.totalorder %s17, 1
      %p131 = scmp.ne.s32.totalorder %s126, %s128
      %p132 = scmp.eq.s32.totalorder %s17, 0
      %p133 = por %p131, %p132
      %p134 = scmp.ne.s32.totalorder %s126, %s128
      %p135 = scmp.eq.s32.totalorder %s22, 1
      %p136 = por %p134, %p135
      %p137 = scmp.ne.s32.totalorder %s128, %s129
      %p138 = scmp.eq.s32.totalorder %s22, 0
      %p139 = por %p137, %p138
      %p140 = scmp.ne.s32.totalorder %s128, %s129
      %p141 = scmp.eq.s32.totalorder %s23, 1
      %p142 = por %p140, %p141
      %p144 = scmp.ne.s32.totalorder %s129, %s143
      %p145 = scmp.eq.s32.totalorder %s23, 0
      %p146 = por %p144, %p145
      %s148 = sadd.s32 %s147, 1
      %p151 = scmp.eq.s32.totalorder %s17, 1
      %p152 = scmp.ne.s32.totalorder %s147, %s149
      %p153 = scmp.eq.s32.totalorder %s17, 0
      %p154 = por %p152, %p153
      %p155 = scmp.ne.s32.totalorder %s147, %s149
      %p156 = scmp.eq.s32.totalorder %s22, 1
      %p157 = por %p155, %p156
      %p158 = scmp.ne.s32.totalorder %s149, %s150
      %p159 = scmp.eq.s32.totalorder %s22, 0
      %p160 = por %p158, %p159
      %p161 = scmp.ne.s32.totalorder %s149, %s150
      %p162 = scmp.eq.s32.totalorder %s23, 1
      %p163 = por %p161, %p162
      %p165 = scmp.ne.s32.totalorder %s150, %s164
      %p166 = scmp.eq.s32.totalorder %s23, 0
      %p167 = por %p165, %p166
      %s169 = sadd.s32 %s168, 1
      %p172 = scmp.eq.s32.totalorder %s17, 1
      %p173 = scmp.ne.s32.totalorder %s168, %s170
      %p174 = scmp.eq.s32.totalorder %s17, 0
      %p175 = por %p173, %p174
      %p176 = scmp.ne.s32.totalorder %s168, %s170
      %p177 = scmp.eq.s32.totalorder %s22, 1
      %p178 = por %p176, %p177
      %p179 = scmp.ne.s32.totalorder %s170, %s171
      %p180 = scmp.eq.s32.totalorder %s22, 0
      %p181 = por %p179, %p180
      %p182 = scmp.ne.s32.totalorder %s170, %s171
      %p183 = scmp.eq.s32.totalorder %s23, 1
      %p184 = por %p182, %p183
      %p186 = scmp.ne.s32.totalorder %s171, %s185
      %p187 = scmp.eq.s32.totalorder %s23, 0
      %p188 = por %p186, %p187
      %s190 = sadd.s32 %s189, 1
      %p193 = scmp.eq.s32.totalorder %s17, 1
      %p194 = scmp.ne.s32.totalorder %s189, %s191
      %p195 = scmp.eq.s32.totalorder %s17, 0
      %p196 = por %p194, %p195
      %p197 = scmp.ne.s32.totalorder %s189, %s191
      %p198 = scmp.eq.s32.totalorder %s22, 1
      %p199 = por %p197, %p198
      %p200 = scmp.ne.s32.totalorder %s191, %s192
      %p201 = scmp.eq.s32.totalorder %s22, 0
      %p202 = por %p200, %p201
      %p203 = scmp.ne.s32.totalorder %s191, %s192
      %p204 = scmp.eq.s32.totalorder %s23, 1
      %p205 = por %p203, %p204
      %p207 = scmp.ne.s32.totalorder %s192, %s206
      %p208 = scmp.eq.s32.totalorder %s23, 0
      %p209 = por %p207, %p208
      %s210 = ssub.s32 %s24, %s36
      %s211 = ssub.s32 %s25, %s32
      %s212 = sor.u32 %s210, %s211
      %p213 = scmp.eq.s32.totalorder %s212, 0
      %s215 = sadd.s32 %s214, 1
      %s216 = scalar_select %p213, %s214, %s215
      %p219 = pneg %p213
      %p220 = scmp.eq.s32.totalorder %s17, 1
      %p221 = por %p219, %p220
      %p222 = scmp.ne.s32.totalorder %s214, %s217
      %p223 = scmp.eq.s32.totalorder %s17, 0
      %p224 = por %p222, %p223
      %p225 = scmp.ne.s32.totalorder %s214, %s217
      %p226 = scmp.eq.s32.totalorder %s22, 1
      %p227 = por %p225, %p226
      %p228 = scmp.ne.s32.totalorder %s217, %s218
      %p229 = scmp.eq.s32.totalorder %s22, 0
      %p230 = por %p228, %p229
      %p231 = scmp.ne.s32.totalorder %s217, %s218
      %p232 = scmp.eq.s32.totalorder %s23, 1
      %p233 = por %p231, %p232
      %p235 = scmp.ne.s32.totalorder %s218, %s234
      %p236 = scmp.eq.s32.totalorder %s23, 0
      %p237 = por %p235, %p236
      %p238 = scmp.le.s32.totalorder 1, %s17
      %p239 = scmp.lt.s32.totalorder %s17, 3
      %p240 = pnand %p238, %p239
      %p241 = pneg %p240
      // Predicated region
      $region9: #{tpu_custom_call.1} parent=5 // pred_check
        _
      $region10: #{tpu_custom_call.1} parent=5 // pred_check_branch
        %243 = sbr.rel (%p240) target = $region12
      $region11: #{tpu_custom_call.1} parent=5 // pred_region
        %s244 = ssub.s32 %s17, 1
        // Predicated region
        $region13: #{tpu_custom_call.1} parent=11 // pred_check
          %p245 = pneg %p76
        $region14: #{tpu_custom_call.1} parent=11 // pred_check_branch
          %247 = sbr.rel (%p245) target = $region16
        $region15: #{tpu_custom_call.1} parent=11 // pred_region
          _
        $region16: #{tpu_custom_call.1} parent=11 // pred_fallthru
          _
        // Predicated region
        $region17: #{tpu_custom_call.1} parent=11 // pred_check
          %p248 = pneg %p97
        $region18: #{tpu_custom_call.1} parent=11 // pred_check_branch
          %250 = sbr.rel (%p248) target = $region20
        $region19: #{tpu_custom_call.1} parent=11 // pred_region
          _
        $region20: #{tpu_custom_call.1} parent=11 // pred_fallthru
          _
        // Predicated region
        $region21: #{tpu_custom_call.1} parent=11 // pred_check
          %p251 = pneg %p118
        $region22: #{tpu_custom_call.1} parent=11 // pred_check_branch
          %253 = sbr.rel (%p251) target = $region24
        $region23: #{tpu_custom_call.1} parent=11 // pred_region
          _
        $region24: #{tpu_custom_call.1} parent=11 // pred_fallthru
          _
        // Predicated region
        $region25: #{tpu_custom_call.1} parent=11 // pred_check
          %p254 = pneg %p139
        $region26: #{tpu_custom_call.1} parent=11 // pred_check_branch
          %256 = sbr.rel (%p254) target = $region28
        $region27: #{tpu_custom_call.1} parent=11 // pred_region
          _
        $region28: #{tpu_custom_call.1} parent=11 // pred_fallthru
          _
        // Predicated region
        $region29: #{tpu_custom_call.1} parent=11 // pred_check
          %p257 = pneg %p160
        $region30: #{tpu_custom_call.1} parent=11 // pred_check_branch
          %259 = sbr.rel (%p257) target = $region32
        $region31: #{tpu_custom_call.1} parent=11 // pred_region
          _
        $region32: #{tpu_custom_call.1} parent=11 // pred_fallthru
          _
        // Predicated region
        $region33: #{tpu_custom_call.1} parent=11 // pred_check
          %p260 = pneg %p181
        $region34: #{tpu_custom_call.1} parent=11 // pred_check_branch
          %262 = sbr.rel (%p260) target = $region36
        $region35: #{tpu_custom_call.1} parent=11 // pred_region
          _
        $region36: #{tpu_custom_call.1} parent=11 // pred_fallthru
          _
        // Predicated region
        $region37: #{tpu_custom_call.1} parent=11 // pred_check
          %p263 = pneg %p202
        $region38: #{tpu_custom_call.1} parent=11 // pred_check_branch
          %265 = sbr.rel (%p263) target = $region40
        $region39: #{tpu_custom_call.1} parent=11 // pred_region
          _
        $region40: #{tpu_custom_call.1} parent=11 // pred_fallthru
          _
      $region12: #{tpu_custom_call.1} parent=5 // pred_fallthru
        _
      %p266 = scmp.lt.s32.totalorder %s17, 2
      // Predicated region
      $region41: #{tpu_custom_call.1} parent=5 // pred_check
        %p267 = pneg %p266
      $region42: #{tpu_custom_call.1} parent=5 // pred_check_branch
        %269 = sbr.rel (%p267) target = $region44
      $region43: #{tpu_custom_call.1} parent=5 // pred_region
        // Predicated region
        $region45: #{tpu_custom_call.1} parent=43 // pred_check
          %p270 = pneg %p49
        $region46: #{tpu_custom_call.1} parent=43 // pred_check_branch
          %272 = sbr.rel (%p270) target = $region48
        $region47: #{tpu_custom_call.1} parent=43 // pred_region
          %p273 = scmp.lt.s32.totalorder %s24, 1
          %s274 = scalar_select %p273, %s24, 1
          %s275 = smul.addr %s274, 2
          %s276 = smul.addr %s275, 4
          %s277 = scalar_lea.vmem %s0, %s276
        $region48: #{tpu_custom_call.1} parent=43 // pred_fallthru
          _
      $region44: #{tpu_custom_call.1} parent=5 // pred_fallthru
        _
      %p278 = scmp.le.s32.totalorder 1, %s17
      %p279 = scmp.lt.s32.totalorder %s17, 3
      %p280 = pnand %p278, %p279
      %p281 = pneg %p280
      // Predicated region
      $region49: #{tpu_custom_call.1} parent=5 // pred_check
        _
      $region50: #{tpu_custom_call.1} parent=5 // pred_check_branch
        %283 = sbr.rel (%p280) target = $region52
      $region51: #{tpu_custom_call.1} parent=5 // pred_region
        %s284 = ssub.s32 %s17, 1
        %p285 = scmp.lt.s32.totalorder %s26, 1
        %s286 = scalar_select %p285, %s26, 1
        %s287 = smul.addr %s286, 2
        %s288 = smul.addr %s287, 4
        %s289 = scalar_lea.vmem %s0, %s288
        %p290 = pneg %p55
        %p291 = pneg %p52
        %p292 = pneg %p76
        %p293 = pneg %p73
        %p294 = pneg %p97
        %p295 = pneg %p94
        %p296 = pneg %p118
        %p297 = pneg %p115
        %p298 = pneg %p139
        %p299 = pneg %p136
        %p300 = pneg %p160
        %p301 = pneg %p157
        %p302 = pneg %p181
        %p303 = pneg %p178
        %p304 = pneg %p202
        %p305 = pneg %p199
        %p306 = pneg %p230
        %p307 = pneg %p227
        %s308 = sand.u32 %s217, 1
        %s309 = scalar_lea.sflag [#allocation5], %s308
        %s310 = sand.u32 %s217, 1
        %s311 = smul.addr %s310, 8
        %s312 = scalar_lea.vmem [#allocation4], %s311
        %p313 = scmp.lt.s32.totalorder %s26, 1
        %s314 = scalar_select %p313, %s26, 1
        %s315 = smul.addr %s314, 2
        %s316 = smul.addr %s315, 4
        %s317 = scalar_lea.vmem %s0, %s316
        %s318 = smul.u32 2, %s27
        %p320 = scmp.eq.s32.totalorder %s27, 0
        // Predicated region
        $region53: #{tpu_custom_call.1} parent=51 // pred_check
          %p321 = pneg %p320
        $region54: #{tpu_custom_call.1} parent=51 // pred_check_branch
          %323 = sbr.rel (%p321) target = $region56
        $region55: #{tpu_custom_call.1} parent=51 // pred_region
          %v324 = vld [vmem:[%s317] sm:$0xff]
          %v325 = vld [vmem:[%s2] sm:$0xff]
          %v326 = vld [vmem:[%s5] sm:$0xff]
          %328 = vset.pattern.permute.xlu0 0
          %329 = vperm.xlu0 %328, %v326
          %v330 = vpop.permute.xlu0 %329
          %333 = vst [vmem:[#allocation1] ss:$2 sm:$0xff] %v324
          %v334 = vld.sshfl [vmem:[#allocation1] sm:$0xff pattern:$0x75316420]
          %v335 = vld.sshfl [vmem:[#allocation1 + $0x8] sm:$0xff pattern:$0x75316420]
          %vm336 = vcmask 31744
          %v338 = vsel %vm336, %v325, 0
          %vm340 = vcmask 1043456
          %v341 = vsel %vm340, %v334, 0
          %v343 = vsel %vm340, %v335, 0
          %345 = vmatpush.msra.mxu0 0.0
          %346 = vmatpush.msra.mxu0 0.0
          %347 = vmatpush.msra.mxu0 0.0
          %348 = vmatpush.msra.mxu0 0.0
          %349 = vmatpush.msra.mxu0 0.0
          %350 = vmatpush.msra.mxu0 0.0
          %351 = vmatpush.msra.mxu0 0.0
          %352 = vmatpush.msra.mxu0 0.0
          %353 = vmatpush.msra.mxu0 0.0
          %354 = vmatpush.msra.mxu0 0.0
          %355 = vmatpush.msra.mxu0 0.0
          %356 = vmatpush.msra.mxu0 0.0
          %357 = vmatpush.msra.mxu0 0.0
          %358 = vmatpush.msra.mxu0 0.0
          %359 = vmatpush.msra.mxu0 0.0
          %360 = vmatpush.msra.mxu0 %v341
          %361 = vmatmul.f32.gmra.mxu0 %v338
          %v362 = vpop.f32.mrf.mxu0
          %v363 = vadd.f32 %v330, %v362
          %364 = vdwg.mxu0
          %365 = vmatpush.msra.mxu0 0.0
          %366 = vmatpush.msra.mxu0 0.0
          %367 = vmatpush.msra.mxu0 0.0
          %368 = vmatpush.msra.mxu0 0.0
          %369 = vmatpush.msra.mxu0 0.0
          %370 = vmatpush.msra.mxu0 0.0
          %371 = vmatpush.msra.mxu0 0.0
          %372 = vmatpush.msra.mxu0 0.0
          %373 = vmatpush.msra.mxu0 0.0
          %374 = vmatpush.msra.mxu0 0.0
          %375 = vmatpush.msra.mxu0 0.0
          %376 = vmatpush.msra.mxu0 0.0
          %377 = vmatpush.msra.mxu0 0.0
          %378 = vmatpush.msra.mxu0 0.0
          %379 = vmatpush.msra.mxu0 0.0
          %380 = vmatpush.msra.mxu0 %v343
          %381 = vmatmul.f32.gmra.mxu0 %v338
          %v382 = vpop.f32.mrf.mxu0
          %v383 = vadd.f32 %v330, %v382
          %384 = vdwg.mxu0
          %v385 = vpack.c.bf16 %v383, %v363
          %386 = vst [vmem:[#allocation2] sm:$0xff] %v385
          %v387 = vld [vmem:[%s3] sm:$0xff]
          %v388 = vld [vmem:[%s6] sm:$0xff]
          %390 = vset.pattern.permute.xlu0 0
          %391 = vperm.xlu0 %390, %v388
          %v392 = vpop.permute.xlu0 %391
          %394 = vst [vmem:[#allocation1] ss:$2 sm:$0xff] %v324
          %v395 = vld.sshfl [vmem:[#allocation1] sm:$0xff pattern:$0x75316420]
          %v396 = vld.sshfl [vmem:[#allocation1 + $0x8] sm:$0xff pattern:$0x75316420]
          %v398 = vsel %vm336, %v387, 0
          %v400 = vsel %vm340, %v395, 0
          %v402 = vsel %vm340, %v396, 0
          %404 = vmatpush.msra.mxu0 0.0
          %405 = vmatpush.msra.mxu0 0.0
          %406 = vmatpush.msra.mxu0 0.0
          %407 = vmatpush.msra.mxu0 0.0
          %408 = vmatpush.msra.mxu0 0.0
          %409 = vmatpush.msra.mxu0 0.0
          %410 = vmatpush.msra.mxu0 0.0
          %411 = vmatpush.msra.mxu0 0.0
          %412 = vmatpush.msra.mxu0 0.0
          %413 = vmatpush.msra.mxu0 0.0
          %414 = vmatpush.msra.mxu0 0.0
          %415 = vmatpush.msra.mxu0 0.0
          %416 = vmatpush.msra.mxu0 0.0
          %417 = vmatpush.msra.mxu0 0.0
          %418 = vmatpush.msra.mxu0 0.0
          %419 = vmatpush.msra.mxu0 %v400
          %420 = vmatmul.f32.gmra.mxu0 %v398
          %v421 = vpop.f32.mrf.mxu0
          %v422 = vadd.f32 %v392, %v421
          %423 = vdwg.mxu0
          %424 = vmatpush.msra.mxu0 0.0
          %425 = vmatpush.msra.mxu0 0.0
          %426 = vmatpush.msra.mxu0 0.0
          %427 = vmatpush.msra.mxu0 0.0
          %428 = vmatpush.msra.mxu0 0.0
          %429 = vmatpush.msra.mxu0 0.0
          %430 = vmatpush.msra.mxu0 0.0
          %431 = vmatpush.msra.mxu0 0.0
          %432 = vmatpush.msra.mxu0 0.0
          %433 = vmatpush.msra.mxu0 0.0
          %434 = vmatpush.msra.mxu0 0.0
          %435 = vmatpush.msra.mxu0 0.0
          %436 = vmatpush.msra.mxu0 0.0
          %437 = vmatpush.msra.mxu0 0.0
          %438 = vmatpush.msra.mxu0 0.0
          %439 = vmatpush.msra.mxu0 %v402
          %440 = vmatmul.f32.gmra.mxu0 %v398
          %v441 = vpop.f32.mrf.mxu0
          %v442 = vadd.f32 %v392, %v441
          %443 = vdwg.mxu0
          %v444 = vpack.c.bf16 %v442, %v422
          %445 = vst [vmem:[#allocation3] sm:$0xff] %v444
        $region56: #{tpu_custom_call.1} parent=51 // pred_fallthru
          _
        %s446 = smul.u32 %s27, 256
        %s447 = sshra.s32 %s446, 7
        %s448 = sand.u32 %s446, 127
        %s449 = smul.addr %s447, 4
        %s450 = scalar_lea.vmem %s317, %s449
        %v451 = vld [vmem:[%s450] sm:$0xff]
        %v452 = vld [vmem:[%s1] sm:$0xff]
        %v453 = vld [vmem:[%s4] sm:$0xff]
        %455 = vset.pattern.permute.xlu0 0
        %456 = vperm.xlu0 %455, %v453
        %v457 = vpop.permute.xlu0 %456
        %460 = vst [vmem:[#allocation1] ss:$2 sm:$0xff] %v451
        %v461 = vld.sshfl [vmem:[#allocation1] sm:$0xff pattern:$0x75316420]
        %v462 = vld.sshfl [vmem:[#allocation1 + $0x8] sm:$0xff pattern:$0x75316420]
        %vm463 = vcmask 31744
        %v465 = vsel %vm463, %v452, 0
        %vm467 = vcmask 1043456
        %v468 = vsel %vm467, %v461, 0
        %v470 = vsel %vm467, %v462, 0
        %472 = vmatpush.msra.mxu0 0.0
        %473 = vmatpush.msra.mxu0 0.0
        %474 = vmatpush.msra.mxu0 0.0
        %475 = vmatpush.msra.mxu0 0.0
        %476 = vmatpush.msra.mxu0 0.0
        %477 = vmatpush.msra.mxu0 0.0
        %478 = vmatpush.msra.mxu0 0.0
        %479 = vmatpush.msra.mxu0 0.0
        %480 = vmatpush.msra.mxu0 0.0
        %481 = vmatpush.msra.mxu0 0.0
        %482 = vmatpush.msra.mxu0 0.0
        %483 = vmatpush.msra.mxu0 0.0
        %484 = vmatpush.msra.mxu0 0.0
        %485 = vmatpush.msra.mxu0 0.0
        %486 = vmatpush.msra.mxu0 0.0
        %487 = vmatpush.msra.mxu0 %v468
        %488 = vmatmul.f32.gmra.mxu0 %v465
        %v489 = vpop.f32.mrf.mxu0
        %v490 = vadd.f32 %v457, %v489
        %491 = vdwg.mxu0
        %492 = vmatpush.msra.mxu0 0.0
        %493 = vmatpush.msra.mxu0 0.0
        %494 = vmatpush.msra.mxu0 0.0
        %495 = vmatpush.msra.mxu0 0.0
        %496 = vmatpush.msra.mxu0 0.0
        %497 = vmatpush.msra.mxu0 0.0
        %498 = vmatpush.msra.mxu0 0.0
        %499 = vmatpush.msra.mxu0 0.0
        %500 = vmatpush.msra.mxu0 0.0
        %501 = vmatpush.msra.mxu0 0.0
        %502 = vmatpush.msra.mxu0 0.0
        %503 = vmatpush.msra.mxu0 0.0
        %504 = vmatpush.msra.mxu0 0.0
        %505 = vmatpush.msra.mxu0 0.0
        %506 = vmatpush.msra.mxu0 0.0
        %507 = vmatpush.msra.mxu0 %v470
        %508 = vmatmul.f32.gmra.mxu0 %v465
        %v509 = vpop.f32.mrf.mxu0
        %v510 = vadd.f32 %v457, %v509
        %511 = vdwg.mxu0
        %v512 = vld [vmem:[#allocation2] sm:$0xff]
        %v513 = vpack.c.bf16 %v490, %v490
        %v514 = vpack.c.bf16 %v510, %v510
        %v516 = vunpack.c.l.b16 %v512
        %v517 = vunpack.c.h.b16 %v512
        %v518 = vpack.c.b16 %v516, %v516
        %v519 = vpack.c.b16 %v517, %v517
        %522 = vxpose.binary.xlu0.c.b16.start [1/16] %v519, %v518, 128
        %523 = vxpose.binary.xlu0.c.b16.cont [2/16] 0, 0, 128
        %524 = vxpose.binary.xlu0.c.b16.cont [3/16] 0, 0, 128
        %525 = vxpose.binary.xlu0.c.b16.cont [4/16] 0, 0, 128
        %526 = vxpose.binary.xlu0.c.b16.cont [5/16] 0, 0, 128
        %527 = vxpose.binary.xlu0.c.b16.cont [6/16] 0, 0, 128
        %528 = vxpose.binary.xlu0.c.b16.cont [7/16] 0, 0, 128
        %529 = vxpose.binary.xlu0.c.b16.end [8/16] 0, 0, 128
        %v530 = vpop.trf.xlu0
        %v531 = vpop.trf.xlu0
        %v532 = vpop.trf.xlu0
        %v533 = vpop.trf.xlu0
        %v534 = vpop.trf.xlu0
        %v535 = vpop.trf.xlu0
        %v536 = vpop.trf.xlu0
        %v537 = vpop.trf.xlu0
        %v538 = vpop.trf.xlu0
        %v539 = vpop.trf.xlu0
        %v540 = vpop.trf.xlu0
        %v541 = vpop.trf.xlu0
        %v542 = vpop.trf.xlu0
        %v543 = vpop.trf.xlu0
        %v544 = vpop.trf.xlu0
        %v545 = vpop.trf.xlu0
        %vm546 = vcmask 64512
        %v548 = vsel %vm546, %v530, 0
        %v551 = vsel %vm546, %v532, 0
        %v554 = vsel %vm546, %v534, 0
        %v557 = vsel %vm546, %v536, 0
        %v560 = vsel %vm546, %v538, 0
        %v563 = vsel %vm546, %v540, 0
        %v566 = vsel %vm546, %v542, 0
        %v569 = vsel %vm546, %v544, 0
        %v572 = vsel %vm546, %v531, 0
        %v575 = vsel %vm546, %v533, 0
        %v578 = vsel %vm546, %v535, 0
        %v581 = vsel %vm546, %v537, 0
        %v584 = vsel %vm546, %v539, 0
        %v587 = vsel %vm546, %v541, 0
        %v590 = vsel %vm546, %v543, 0
        %v593 = vsel %vm546, %v545, 0
        %v596 = vsel %vm467, %v513, 0
        %v599 = vsel %vm467, %v514, 0
        %601 = vmatpush.bf16.msra.mxu0 0
        %602 = vmatpush.bf16.msra.mxu0 0
        %603 = vmatpush.bf16.msra.mxu0 0
        %604 = vmatpush.bf16.msra.mxu0 0
        %605 = vmatpush.bf16.msra.mxu0 0
        %606 = vmatpush.bf16.msra.mxu0 0
        %607 = vmatpush.bf16.msra.mxu0 0
        %608 = vmatpush.bf16.msra.mxu0 %v596
        %609 = vmatmul.bf16.gmra.mxu0 %v548
        %v610 = vpop.f32.mrf.mxu0
        %v611 = vadd.f32 0.0, %v610
        %v612 = vpop.f32.mrf.mxu0
        %v613 = vadd.f32 0.0, %v612
        %614 = vmatmul.bf16.gmra.mxu0 %v551
        %v615 = vpop.f32.mrf.mxu0
        %v616 = vadd.f32 0.0, %v615
        %v617 = vpop.f32.mrf.mxu0
        %v618 = vadd.f32 0.0, %v617
        %619 = vmatmul.bf16.gmra.mxu0 %v554
        %v620 = vpop.f32.mrf.mxu0
        %v621 = vadd.f32 0.0, %v620
        %v622 = vpop.f32.mrf.mxu0
        %v623 = vadd.f32 0.0, %v622
        %624 = vmatmul.bf16.gmra.mxu0 %v557
        %v625 = vpop.f32.mrf.mxu0
        %v626 = vadd.f32 0.0, %v625
        %v627 = vpop.f32.mrf.mxu0
        %v628 = vadd.f32 0.0, %v627
        %629 = vmatmul.bf16.gmra.mxu0 %v560
        %v630 = vpop.f32.mrf.mxu0
        %v631 = vadd.f32 0.0, %v630
        %v632 = vpop.f32.mrf.mxu0
        %v633 = vadd.f32 0.0, %v632
        %634 = vmatmul.bf16.gmra.mxu0 %v563
        %v635 = vpop.f32.mrf.mxu0
        %v636 = vadd.f32 0.0, %v635
        %v637 = vpop.f32.mrf.mxu0
        %v638 = vadd.f32 0.0, %v637
        %639 = vmatmul.bf16.gmra.mxu0 %v566
        %v640 = vpop.f32.mrf.mxu0
        %v641 = vadd.f32 0.0, %v640
        %v642 = vpop.f32.mrf.mxu0
        %v643 = vadd.f32 0.0, %v642
        %644 = vmatmul.bf16.gmra.mxu0 %v569
        %v645 = vpop.f32.mrf.mxu0
        %v646 = vadd.f32 0.0, %v645
        %v647 = vpop.f32.mrf.mxu0
        %v648 = vadd.f32 0.0, %v647
        %649 = vmatmul.bf16.gmra.mxu0 %v572
        %v650 = vpop.f32.mrf.mxu0
        %v651 = vadd.f32 0.0, %v650
        %v652 = vpop.f32.mrf.mxu0
        %v653 = vadd.f32 0.0, %v652
        %654 = vmatmul.bf16.gmra.mxu0 %v575
        %v655 = vpop.f32.mrf.mxu0
        %v656 = vadd.f32 0.0, %v655
        %v657 = vpop.f32.mrf.mxu0
        %v658 = vadd.f32 0.0, %v657
        %659 = vmatmul.bf16.gmra.mxu0 %v578
        %v660 = vpop.f32.mrf.mxu0
        %v661 = vadd.f32 0.0, %v660
        %v662 = vpop.f32.mrf.mxu0
        %v663 = vadd.f32 0.0, %v662
        %664 = vmatmul.bf16.gmra.mxu0 %v581
        %v665 = vpop.f32.mrf.mxu0
        %v666 = vadd.f32 0.0, %v665
        %v667 = vpop.f32.mrf.mxu0
        %v668 = vadd.f32 0.0, %v667
        %669 = vmatmul.bf16.gmra.mxu0 %v584
        %v670 = vpop.f32.mrf.mxu0
        %v671 = vadd.f32 0.0, %v670
        %v672 = vpop.f32.mrf.mxu0
        %v673 = vadd.f32 0.0, %v672
        %674 = vmatmul.bf16.gmra.mxu0 %v587
        %v675 = vpop.f32.mrf.mxu0
        %v676 = vadd.f32 0.0, %v675
        %v677 = vpop.f32.mrf.mxu0
        %v678 = vadd.f32 0.0, %v677
        %679 = vmatmul.bf16.gmra.mxu0 %v590
        %v680 = vpop.f32.mrf.mxu0
        %v681 = vadd.f32 0.0, %v680
        %v682 = vpop.f32.mrf.mxu0
        %v683 = vadd.f32 0.0, %v682
        %684 = vmatmul.bf16.gmra.mxu0 %v593
        %v685 = vpop.f32.mrf.mxu0
        %v686 = vadd.f32 0.0, %v685
        %v687 = vpop.f32.mrf.mxu0
        %v688 = vadd.f32 0.0, %v687
        %689 = vdwg.mxu0
        %690 = vmatpush.bf16.msra.mxu0 0
        %691 = vmatpush.bf16.msra.mxu0 0
        %692 = vmatpush.bf16.msra.mxu0 0
        %693 = vmatpush.bf16.msra.mxu0 0
        %694 = vmatpush.bf16.msra.mxu0 0
        %695 = vmatpush.bf16.msra.mxu0 0
        %696 = vmatpush.bf16.msra.mxu0 0
        %697 = vmatpush.bf16.msra.mxu0 %v599
        %698 = vmatmul.bf16.gmra.mxu0 %v548
        %v699 = vpop.f32.mrf.mxu0
        %v700 = vadd.f32 0.0, %v699
        %v701 = vpop.f32.mrf.mxu0
        %v702 = vadd.f32 0.0, %v701
        %703 = vmatmul.bf16.gmra.mxu0 %v551
        %v704 = vpop.f32.mrf.mxu0
        %v705 = vadd.f32 0.0, %v704
        %v706 = vpop.f32.mrf.mxu0
        %v707 = vadd.f32 0.0, %v706
        %708 = vmatmul.bf16.gmra.mxu0 %v554
        %v709 = vpop.f32.mrf.mxu0
        %v710 = vadd.f32 0.0, %v709
        %v711 = vpop.f32.mrf.mxu0
        %v712 = vadd.f32 0.0, %v711
        %713 = vmatmul.bf16.gmra.mxu0 %v557
        %v714 = vpop.f32.mrf.mxu0
        %v715 = vadd.f32 0.0, %v714
        %v716 = vpop.f32.mrf.mxu0
        %v717 = vadd.f32 0.0, %v716
        %718 = vmatmul.bf16.gmra.mxu0 %v560
        %v719 = vpop.f32.mrf.mxu0
        %v720 = vadd.f32 0.0, %v719
        %v721 = vpop.f32.mrf.mxu0
        %v722 = vadd.f32 0.0, %v721
        %723 = vmatmul.bf16.gmra.mxu0 %v563
        %v724 = vpop.f32.mrf.mxu0
        %v725 = vadd.f32 0.0, %v724
        %v726 = vpop.f32.mrf.mxu0
        %v727 = vadd.f32 0.0, %v726
        %728 = vmatmul.bf16.gmra.mxu0 %v566
        %v729 = vpop.f32.mrf.mxu0
        %v730 = vadd.f32 0.0, %v729
        %v731 = vpop.f32.mrf.mxu0
        %v732 = vadd.f32 0.0, %v731
        %733 = vmatmul.bf16.gmra.mxu0 %v569
        %v734 = vpop.f32.mrf.mxu0
        %v735 = vadd.f32 0.0, %v734
        %v736 = vpop.f32.mrf.mxu0
        %v737 = vadd.f32 0.0, %v736
        %738 = vmatmul.bf16.gmra.mxu0 %v572
        %v739 = vpop.f32.mrf.mxu0
        %v740 = vadd.f32 0.0, %v739
        %v741 = vpop.f32.mrf.mxu0
        %v742 = vadd.f32 0.0, %v741
        %743 = vmatmul.bf16.gmra.mxu0 %v575
        %v744 = vpop.f32.mrf.mxu0
        %v745 = vadd.f32 0.0, %v744
        %v746 = vpop.f32.mrf.mxu0
        %v747 = vadd.f32 0.0, %v746
        %748 = vmatmul.bf16.gmra.mxu0 %v578
        %v749 = vpop.f32.mrf.mxu0
        %v750 = vadd.f32 0.0, %v749
        %v751 = vpop.f32.mrf.mxu0
        %v752 = vadd.f32 0.0, %v751
        %753 = vmatmul.bf16.gmra.mxu0 %v581
        %v754 = vpop.f32.mrf.mxu0
        %v755 = vadd.f32 0.0, %v754
        %v756 = vpop.f32.mrf.mxu0
        %v757 = vadd.f32 0.0, %v756
        %758 = vmatmul.bf16.gmra.mxu0 %v584
        %v759 = vpop.f32.mrf.mxu0
        %v760 = vadd.f32 0.0, %v759
        %v761 = vpop.f32.mrf.mxu0
        %v762 = vadd.f32 0.0, %v761
        %763 = vmatmul.bf16.gmra.mxu0 %v587
        %v764 = vpop.f32.mrf.mxu0
        %v765 = vadd.f32 0.0, %v764
        %v766 = vpop.f32.mrf.mxu0
        %v767 = vadd.f32 0.0, %v766
        %768 = vmatmul.bf16.gmra.mxu0 %v590
        %v769 = vpop.f32.mrf.mxu0
        %v770 = vadd.f32 0.0, %v769
        %v771 = vpop.f32.mrf.mxu0
        %v772 = vadd.f32 0.0, %v771
        %773 = vmatmul.bf16.gmra.mxu0 %v593
        %v774 = vpop.f32.mrf.mxu0
        %v775 = vadd.f32 0.0, %v774
        %v776 = vpop.f32.mrf.mxu0
        %v777 = vadd.f32 0.0, %v776
        %778 = vdwg.mxu0
        %v779 = vmax.f32 %v611, %v616
        %v780 = vmax.f32 %v613, %v618
        %v781 = vmax.f32 %v779, %v621
        %v782 = vmax.f32 %v780, %v623
        %v783 = vmax.f32 %v781, %v626
        %v784 = vmax.f32 %v782, %v628
        %v785 = vmax.f32 %v783, %v631
        %v786 = vmax.f32 %v784, %v633
        %v787 = vmax.f32 %v785, %v636
        %v788 = vmax.f32 %v786, %v638
        %v789 = vmax.f32 %v787, %v641
        %v790 = vmax.f32 %v788, %v643
        %v791 = vmax.f32 %v789, %v646
        %v792 = vmax.f32 %v790, %v648
        %v793 = vmax.f32 %v791, %v651
        %v794 = vmax.f32 %v792, %v653
        %v795 = vmax.f32 %v793, %v656
        %v796 = vmax.f32 %v794, %v658
        %v797 = vmax.f32 %v795, %v661
        %v798 = vmax.f32 %v796, %v663
        %v799 = vmax.f32 %v797, %v666
        %v800 = vmax.f32 %v798, %v668
        %v801 = vmax.f32 %v799, %v671
        %v802 = vmax.f32 %v800, %v673
        %v803 = vmax.f32 %v801, %v676
        %v804 = vmax.f32 %v802, %v678
        %v805 = vmax.f32 %v803, %v681
        %v806 = vmax.f32 %v804, %v683
        %v807 = vmax.f32 %v805, %v686
        %v808 = vmax.f32 %v806, %v688
        %v809 = vmax.f32 %v807, %v808
        %v810 = vrot.slane %v809, 4
        %v811 = vmax.f32 %v809, %v810
        %v812 = vrot.slane %v811, 2
        %v813 = vmax.f32 %v811, %v812
        %v814 = vrot.slane %v813, 1
        %v815 = vmax.f32 %v813, %v814
        %v816 = vmax.f32 %v700, %v705
        %v817 = vmax.f32 %v702, %v707
        %v818 = vmax.f32 %v816, %v710
        %v819 = vmax.f32 %v817, %v712
        %v820 = vmax.f32 %v818, %v715
        %v821 = vmax.f32 %v819, %v717
        %v822 = vmax.f32 %v820, %v720
        %v823 = vmax.f32 %v821, %v722
        %v824 = vmax.f32 %v822, %v725
        %v825 = vmax.f32 %v823, %v727
        %v826 = vmax.f32 %v824, %v730
        %v827 = vmax.f32 %v825, %v732
        %v828 = vmax.f32 %v826, %v735
        %v829 = vmax.f32 %v827, %v737
        %v830 = vmax.f32 %v828, %v740
        %v831 = vmax.f32 %v829, %v742
        %v832 = vmax.f32 %v830, %v745
        %v833 = vmax.f32 %v831, %v747
        %v834 = vmax.f32 %v832, %v750
        %v835 = vmax.f32 %v833, %v752
        %v836 = vmax.f32 %v834, %v755
        %v837 = vmax.f32 %v835, %v757
        %v838 = vmax.f32 %v836, %v760
        %v839 = vmax.f32 %v837, %v762
        %v840 = vmax.f32 %v838, %v765
        %v841 = vmax.f32 %v839, %v767
        %v842 = vmax.f32 %v840, %v770
        %v843 = vmax.f32 %v841, %v772
        %v844 = vmax.f32 %v842, %v775
        %v845 = vmax.f32 %v843, %v777
        %v846 = vmax.f32 %v844, %v845
        %v847 = vrot.slane %v846, 4
        %v848 = vmax.f32 %v846, %v847
        %v849 = vrot.slane %v848, 2
        %v850 = vmax.f32 %v848, %v849
        %v851 = vrot.slane %v850, 1
        %v852 = vmax.f32 %v850, %v851
        %v853 = vsub.f32 %v611, %v815
        %v854 = vsub.f32 %v700, %v852
        %v855 = vsub.f32 %v613, %v815
        %v856 = vsub.f32 %v702, %v852
        %v857 = vsub.f32 %v616, %v815
        %v858 = vsub.f32 %v705, %v852
        %v859 = vsub.f32 %v618, %v815
        %v860 = vsub.f32 %v707, %v852
        %v861 = vsub.f32 %v621, %v815
        %v862 = vsub.f32 %v710, %v852
        %v863 = vsub.f32 %v623, %v815
        %v864 = vsub.f32 %v712, %v852
        %v865 = vsub.f32 %v626, %v815
        %v866 = vsub.f32 %v715, %v852
        %v867 = vsub.f32 %v628, %v815
        %v868 = vsub.f32 %v717, %v852
        %v869 = vsub.f32 %v631, %v815
        %v870 = vsub.f32 %v720, %v852
        %v871 = vsub.f32 %v633, %v815
        %v872 = vsub.f32 %v722, %v852
        %v873 = vsub.f32 %v636, %v815
        %v874 = vsub.f32 %v725, %v852
        %v875 = vsub.f32 %v638, %v815
        %v876 = vsub.f32 %v727, %v852
        %v877 = vsub.f32 %v641, %v815
        %v878 = vsub.f32 %v730, %v852
        %v879 = vsub.f32 %v643, %v815
        %v880 = vsub.f32 %v732, %v852
        %v881 = vsub.f32 %v646, %v815
        %v882 = vsub.f32 %v735, %v852
        %v883 = vsub.f32 %v648, %v815
        %v884 = vsub.f32 %v737, %v852
        %v885 = vsub.f32 %v651, %v815
        %v886 = vsub.f32 %v740, %v852
        %v887 = vsub.f32 %v653, %v815
        %v888 = vsub.f32 %v742, %v852
        %v889 = vsub.f32 %v656, %v815
        %v890 = vsub.f32 %v745, %v852
        %v891 = vsub.f32 %v658, %v815
        %v892 = vsub.f32 %v747, %v852
        %v893 = vsub.f32 %v661, %v815
        %v894 = vsub.f32 %v750, %v852
        %v895 = vsub.f32 %v663, %v815
        %v896 = vsub.f32 %v752, %v852
        %v897 = vsub.f32 %v666, %v815
        %v898 = vsub.f32 %v755, %v852
        %v899 = vsub.f32 %v668, %v815
        %v900 = vsub.f32 %v757, %v852
        %v901 = vsub.f32 %v671, %v815
        %v902 = vsub.f32 %v760, %v852
        %v903 = vsub.f32 %v673, %v815
        %v904 = vsub.f32 %v762, %v852
        %v905 = vsub.f32 %v676, %v815
        %v906 = vsub.f32 %v765, %v852
        %v907 = vsub.f32 %v678, %v815
        %v908 = vsub.f32 %v767, %v852
        %v909 = vsub.f32 %v681, %v815
        %v910 = vsub.f32 %v770, %v852
        %v911 = vsub.f32 %v683, %v815
        %v912 = vsub.f32 %v772, %v852
        %v913 = vsub.f32 %v686, %v815
        %v914 = vsub.f32 %v775, %v852
        %v915 = vsub.f32 %v688, %v815
        %v916 = vsub.f32 %v777, %v852
        %v917 = vmul.f32 %v853, 1.442695
        %v918 = vpow.pop %v917
        %v919 = vmul.f32 %v854, 1.442695
        %v920 = vpow.pop %v919
        %v921 = vmul.f32 %v855, 1.442695
        %v922 = vpow.pop %v921
        %v923 = vmul.f32 %v856, 1.442695
        %v924 = vpow.pop %v923
        %v925 = vmul.f32 %v857, 1.442695
        %v926 = vpow.pop %v925
        %v927 = vmul.f32 %v858, 1.442695
        %v928 = vpow.pop %v927
        %v929 = vmul.f32 %v859, 1.442695
        %v930 = vpow.pop %v929
        %v931 = vmul.f32 %v860, 1.442695
        %v932 = vpow.pop %v931
        %v933 = vmul.f32 %v861, 1.442695
        %v934 = vpow.pop %v933
        %v935 = vmul.f32 %v862, 1.442695
        %v936 = vpow.pop %v935
        %v937 = vmul.f32 %v863, 1.442695
        %v938 = vpow.pop %v937
        %v939 = vmul.f32 %v864, 1.442695
        %v940 = vpow.pop %v939
        %v941 = vmul.f32 %v865, 1.442695
        %v942 = vpow.pop %v941
        %v943 = vmul.f32 %v866, 1.442695
        %v944 = vpow.pop %v943
        %v945 = vmul.f32 %v867, 1.442695
        %v946 = vpow.pop %v945
        %v947 = vmul.f32 %v868, 1.442695
        %v948 = vpow.pop %v947
        %v949 = vmul.f32 %v869, 1.442695
        %v950 = vpow.pop %v949
        %v951 = vmul.f32 %v870, 1.442695
        %v952 = vpow.pop %v951
        %v953 = vmul.f32 %v871, 1.442695
        %v954 = vpow.pop %v953
        %v955 = vmul.f32 %v872, 1.442695
        %v956 = vpow.pop %v955
        %v957 = vmul.f32 %v873, 1.442695
        %v958 = vpow.pop %v957
        %v959 = vmul.f32 %v874, 1.442695
        %v960 = vpow.pop %v959
        %v961 = vmul.f32 %v875, 1.442695
        %v962 = vpow.pop %v961
        %v963 = vmul.f32 %v876, 1.442695
        %v964 = vpow.pop %v963
        %v965 = vmul.f32 %v877, 1.442695
        %v966 = vpow.pop %v965
        %v967 = vmul.f32 %v878, 1.442695
        %v968 = vpow.pop %v967
        %v969 = vmul.f32 %v879, 1.442695
        %v970 = vpow.pop %v969
        %v971 = vmul.f32 %v880, 1.442695
        %v972 = vpow.pop %v971
        %v973 = vmul.f32 %v881, 1.442695
        %v974 = vpow.pop %v973
        %v975 = vmul.f32 %v882, 1.442695
        %v976 = vpow.pop %v975
        %v977 = vmul.f32 %v883, 1.442695
        %v978 = vpow.pop %v977
        %v979 = vmul.f32 %v884, 1.442695
        %v980 = vpow.pop %v979
        %v981 = vmul.f32 %v885, 1.442695
        %v982 = vpow.pop %v981
        %v983 = vmul.f32 %v886, 1.442695
        %v984 = vpow.pop %v983
        %v985 = vmul.f32 %v887, 1.442695
        %v986 = vpow.pop %v985
        %v987 = vmul.f32 %v888, 1.442695
        %v988 = vpow.pop %v987
        %v989 = vmul.f32 %v889, 1.442695
        %v990 = vpow.pop %v989
        %v991 = vmul.f32 %v890, 1.442695
        %v992 = vpow.pop %v991
        %v993 = vmul.f32 %v891, 1.442695
        %v994 = vpow.pop %v993
        %v995 = vmul.f32 %v892, 1.442695
        %v996 = vpow.pop %v995
        %v997 = vmul.f32 %v893, 1.442695
        %v998 = vpow.pop %v997
        %v999 = vmul.f32 %v894, 1.442695
        %v1000 = vpow.pop %v999
        %v1001 = vmul.f32 %v895, 1.442695
        %v1002 = vpow.pop %v1001
        %v1003 = vmul.f32 %v896, 1.442695
        %v1004 = vpow.pop %v1003
        %v1005 = vmul.f32 %v897, 1.442695
        %v1006 = vpow.pop %v1005
        %v1007 = vmul.f32 %v898, 1.442695
        %v1008 = vpow.pop %v1007
        %v1009 = vmul.f32 %v899, 1.442695
        %v1010 = vpow.pop %v1009
        %v1011 = vmul.f32 %v900, 1.442695
        %v1012 = vpow.pop %v1011
        %v1013 = vmul.f32 %v901, 1.442695
        %v1014 = vpow.pop %v1013
        %v1015 = vmul.f32 %v902, 1.442695
        %v1016 = vpow.pop %v1015
        %v1017 = vmul.f32 %v903, 1.442695
        %v1018 = vpow.pop %v1017
        %v1019 = vmul.f32 %v904, 1.442695
        %v1020 = vpow.pop %v1019
        %v1021 = vmul.f32 %v905, 1.442695
        %v1022 = vpow.pop %v1021
        %v1023 = vmul.f32 %v906, 1.442695
        %v1024 = vpow.pop %v1023
        %v1025 = vmul.f32 %v907, 1.442695
        %v1026 = vpow.pop %v1025
        %v1027 = vmul.f32 %v908, 1.442695
        %v1028 = vpow.pop %v1027
        %v1029 = vmul.f32 %v909, 1.442695
        %v1030 = vpow.pop %v1029
        %v1031 = vmul.f32 %v910, 1.442695
        %v1032 = vpow.pop %v1031
        %v1033 = vmul.f32 %v911, 1.442695
        %v1034 = vpow.pop %v1033
        %v1035 = vmul.f32 %v912, 1.442695
        %v1036 = vpow.pop %v1035
        %v1037 = vmul.f32 %v913, 1.442695
        %v1038 = vpow.pop %v1037
        %v1039 = vmul.f32 %v914, 1.442695
        %v1040 = vpow.pop %v1039
        %v1041 = vmul.f32 %v915, 1.442695
        %v1042 = vpow.pop %v1041
        %v1043 = vmul.f32 %v916, 1.442695
        %v1044 = vpow.pop %v1043
        %v1045 = vpack.c.bf16 %v922, %v918
        %v1046 = vpack.c.bf16 %v924, %v920
        %v1047 = vpack.c.bf16 %v930, %v926
        %v1048 = vpack.c.bf16 %v932, %v928
        %v1049 = vpack.c.bf16 %v938, %v934
        %v1050 = vpack.c.bf16 %v940, %v936
        %v1051 = vpack.c.bf16 %v946, %v942
        %v1052 = vpack.c.bf16 %v948, %v944
        %v1053 = vpack.c.bf16 %v954, %v950
        %v1054 = vpack.c.bf16 %v956, %v952
        %v1055 = vpack.c.bf16 %v962, %v958
        %v1056 = vpack.c.bf16 %v964, %v960
        %v1057 = vpack.c.bf16 %v970, %v966
        %v1058 = vpack.c.bf16 %v972, %v968
        %v1059 = vpack.c.bf16 %v978, %v974
        %v1060 = vpack.c.bf16 %v980, %v976
        %v1061 = vpack.c.bf16 %v986, %v982
        %v1062 = vpack.c.bf16 %v988, %v984
        %v1063 = vpack.c.bf16 %v994, %v990
        %v1064 = vpack.c.bf16 %v996, %v992
        %v1065 = vpack.c.bf16 %v1002, %v998
        %v1066 = vpack.c.bf16 %v1004, %v1000
        %v1067 = vpack.c.bf16 %v1010, %v1006
        %v1068 = vpack.c.bf16 %v1012, %v1008
        %v1069 = vpack.c.bf16 %v1018, %v1014
        %v1070 = vpack.c.bf16 %v1020, %v1016
        %v1071 = vpack.c.bf16 %v1026, %v1022
        %v1072 = vpack.c.bf16 %v1028, %v1024
        %v1073 = vpack.c.bf16 %v1034, %v1030
        %v1074 = vpack.c.bf16 %v1036, %v1032
        %v1075 = vpack.c.bf16 %v1042, %v1038
        %v1076 = vpack.c.bf16 %v1044, %v1040
        %v1077 = vld [vmem:[#allocation3] sm:$0xff]
        %v1079 = vunpack.c.l.b16 %v1077
        %v1080 = vunpack.c.h.b16 %v1077
        %v1081 = vpack.c.b16 %v1079, %v1079
        %v1082 = vpack.c.b16 %v1080, %v1080
        %1085 = vmatpush.bf16.msra.mxu0 %v1059
        %1086 = vmatpush.bf16.msra.mxu0 %v1057
        %1087 = vmatpush.bf16.msra.mxu0 %v1055
        %1088 = vmatpush.bf16.msra.mxu0 %v1053
        %1089 = vmatpush.bf16.msra.mxu0 %v1051
        %1090 = vmatpush.bf16.msra.mxu0 %v1049
        %1091 = vmatpush.bf16.msra.mxu0 %v1047
        %1092 = vmatpush.bf16.msra.mxu0 %v1045
        %1093 = vmatmul.bf16.gmra.mxu0 %v1081
        %v1094 = vpop.f32.mrf.mxu0
        %v1095 = vadd.f32 0.0, %v1094
        %v1096 = vpop.f32.mrf.mxu0
        %1097 = vdwg.mxu0
        %1098 = vmatpush.bf16.msra.mxu0 %v1075
        %1099 = vmatpush.bf16.msra.mxu0 %v1073
        %1100 = vmatpush.bf16.msra.mxu0 %v1071
        %1101 = vmatpush.bf16.msra.mxu0 %v1069
        %1102 = vmatpush.bf16.msra.mxu0 %v1067
        %1103 = vmatpush.bf16.msra.mxu0 %v1065
        %1104 = vmatpush.bf16.msra.mxu0 %v1063
        %1105 = vmatpush.bf16.msra.mxu0 %v1061
        %1106 = vmatmul.bf16.gmra.mxu0 %v1082
        %v1107 = vpop.f32.mrf.mxu0
        %v1108 = vadd.f32 %v1095, %v1107
        %v1109 = vpop.f32.mrf.mxu0
        %1110 = vdwg.mxu0
        %1111 = vmatpush.bf16.msra.mxu0 %v1060
        %1112 = vmatpush.bf16.msra.mxu0 %v1058
        %1113 = vmatpush.bf16.msra.mxu0 %v1056
        %1114 = vmatpush.bf16.msra.mxu0 %v1054
        %1115 = vmatpush.bf16.msra.mxu0 %v1052
        %1116 = vmatpush.bf16.msra.mxu0 %v1050
        %1117 = vmatpush.bf16.msra.mxu0 %v1048
        %1118 = vmatpush.bf16.msra.mxu0 %v1046
        %1119 = vmatmul.bf16.gmra.mxu0 %v1081
        %v1120 = vpop.f32.mrf.mxu0
        %v1121 = vadd.f32 0.0, %v1120
        %v1122 = vpop.f32.mrf.mxu0
        %1123 = vdwg.mxu0
        %1124 = vmatpush.bf16.msra.mxu0 %v1076
        %1125 = vmatpush.bf16.msra.mxu0 %v1074
        %1126 = vmatpush.bf16.msra.mxu0 %v1072
        %1127 = vmatpush.bf16.msra.mxu0 %v1070
        %1128 = vmatpush.bf16.msra.mxu0 %v1068
        %1129 = vmatpush.bf16.msra.mxu0 %v1066
        %1130 = vmatpush.bf16.msra.mxu0 %v1064
        %1131 = vmatpush.bf16.msra.mxu0 %v1062
        %1132 = vmatmul.bf16.gmra.mxu0 %v1082
        %v1133 = vpop.f32.mrf.mxu0
        %v1134 = vadd.f32 %v1121, %v1133
        %v1135 = vpop.f32.mrf.mxu0
        %1136 = vdwg.mxu0
        %v1137 = vrcp.pop %v1108
        %v1138 = vmul.f32 %v1108, %v1137
        %v1139 = vsub.f32 1.0, %v1138
        %v1140 = vmul.f32 %v1137, %v1139
        %v1141 = vadd.f32 %v1137, %v1140
        %vm1142 = vweird.f32 %v1108
        %vm1143 = vweird.f32 %v1137
        %vm1144 = vmor %vm1142, %vm1143
        %v1145 = vsel %vm1144, %v1137, %v1141
        %v1146 = vand.u32 2147483647, %v1108
        %vm1147 = vcmp.eq.f32.partialorder %v1146, 8.507059e+37
        %v1148 = vand.u32 %v1108, 2147483648
        %v1149 = vor.u32 1.1754944e-38, %v1148
        %v1150 = vsel %vm1147, %v1149, %v1145
        %v1151 = vmul.f32 1.0, %v1150
        %v1152 = vrcp.pop %v1134
        %v1153 = vmul.f32 %v1134, %v1152
        %v1154 = vsub.f32 1.0, %v1153
        %v1155 = vmul.f32 %v1152, %v1154
        %v1156 = vadd.f32 %v1152, %v1155
        %vm1157 = vweird.f32 %v1134
        %vm1158 = vweird.f32 %v1152
        %vm1159 = vmor %vm1157, %vm1158
        %v1160 = vsel %vm1159, %v1152, %v1156
        %v1161 = vand.u32 2147483647, %v1134
        %vm1162 = vcmp.eq.f32.partialorder %v1161, 8.507059e+37
        %v1163 = vand.u32 %v1134, 2147483648
        %v1164 = vor.u32 1.1754944e-38, %v1163
        %v1165 = vsel %vm1162, %v1164, %v1160
        %v1166 = vmul.f32 1.0, %v1165
        %v1167 = vperm.slane %v1151, 4
        %v1168 = vperm.slane %v1166, 4
        %v1169 = vmul.f32 %v1108, %v1167
        %v1170 = vmul.f32 %v1134, %v1168
        %v1171 = vld [vmem:[%s7] sm:$0xf]
        %1173 = vset.pattern.permute.xlu0 0
        %1174 = vperm.xlu0 %1173, %v1171
        %v1175 = vpop.permute.xlu0 %1174
        %v1177 = vadd.f32 %v1169, %v1175
        %v1178 = vadd.f32 %v1170, %v1175
        %1179 = vst [vmem:[#allocation1] ss:$2 sm:$0xff] %v451
        %v1180 = vld.sshfl [vmem:[#allocation1] sm:$0xff pattern:$0x75316420]
        %v1181 = vld.sshfl [vmem:[#allocation1 + $0x8] sm:$0xff pattern:$0x75316420]
        %v1184 = vadd.f32 %v1177, %v1180
        %v1185 = vadd.f32 %v1178, %v1181
        %v1188 = vrot.slane %v1185, 4
        %v1189 = vsel %vm467, %v1184, %v1188
        %1191 = vst [vmem:[%s312] sm:$0xff] %v1189
        %s1192 = sand.u32 %s217, 1
        %s1193 = scalar_lea.sflag [#allocation5], %s1192
        %s1194 = sand.u32 %s217, 1
        %s1195 = smul.addr %s1194, 8
        %s1196 = scalar_lea.vmem [#allocation4], %s1195
        // Predicated region
        $region57: #{tpu_custom_call.1} parent=51 // pred_check
          %p1197 = pneg %p227
        $region58: #{tpu_custom_call.1} parent=51 // pred_check_branch
          %1199 = sbr.rel (%p1197) target = $region60
        $region59: #{tpu_custom_call.1} parent=51 // pred_region
          %s1200 = smul.u32 2, %s27
          %1202 = vsyncadd %s1193, 0
          %s1203 = smul.addr %s26, 2
          %s1204 = sadd.s32 %s1200, %s1203
          %s1205 = smul.addr %s1204, 4
          %s1206 = scalar_lea.hbm %s8, %s1205
          %s1208 = sshll.u32 %s1196, 4
          %s1209 = int_to_ptr.vmem [resolvable:$true] %s1208
          %s1210 = sshll.u32 %s1206, 4
          %s1211 = int_to_ptr.hbm [resolvable:$true] %s1210
          %1213 = dma.vmem_to_hbm [thread:$0]  %s1209, 128, %s1211, %s1193
        $region60: #{tpu_custom_call.1} parent=51 // pred_fallthru
          _
      $region52: #{tpu_custom_call.1} parent=5 // pred_fallthru
        _
      %p1214 = scmp.le.s32.totalorder 2, %s17
      // Predicated region
      $region61: #{tpu_custom_call.1} parent=5 // pred_check
        %p1215 = pneg %p1214
      $region62: #{tpu_custom_call.1} parent=5 // pred_check_branch
        %1217 = sbr.rel (%p1215) target = $region64
      $region63: #{tpu_custom_call.1} parent=5 // pred_region
        %s1218 = ssub.s32 %s17, 2
        // Predicated region
        $region65: #{tpu_custom_call.1} parent=63 // pred_check
          %p1219 = pneg %p233
        $region66: #{tpu_custom_call.1} parent=63 // pred_check_branch
          %1221 = sbr.rel (%p1219) target = $region68
        $region67: #{tpu_custom_call.1} parent=63 // pred_region
          %s1222 = sand.u32 %s218, 1
          %s1223 = scalar_lea.sflag [#allocation5], %s1222
          %s1224 = sand.u32 %s218, 1
          %s1225 = smul.addr %s1224, 8
          %s1226 = scalar_lea.vmem [#allocation4], %s1225
          %1228 = dma.done %s1223, 128
        $region68: #{tpu_custom_call.1} parent=63 // pred_fallthru
          _
      $region64: #{tpu_custom_call.1} parent=5 // pred_fallthru
        _
    $region6: #{tpu_custom_call.1} parent=1 // loop_footer
      %s21 = sadd.s32 1, %s17
    $region7: #{tpu_custom_call.1} parent=1 // loop_footer_branch
      %16 = sbr.rel target = $region3
    $region8: #{tpu_custom_call.1} parent=1 // loop_exit
      _
    %1229 = vsyncpa [#allocation5], 1
    %s1230 = scalar_lea.sflag [#allocation5], 1
    %1231 = vsyncpa %s1230, 1

</llo_original>
